<compile_context>
chip_gen: v7x
topology: tpu7x:2x2x1
jax: 0.10.0
libtpu: 0.0.40
codegen_flags: <defaults>
</compile_context>

<pallas_src>
import functools

import jax
import jax.numpy as jnp
from jax.experimental import pallas as pl
from jax.experimental.pallas import tpu as pltpu

D_IN = 48
H1, H1_PAD = 200, 256
H2, H2_PAD = 80, 128
D_OUT, D_OUT_PAD = 1, 128


def _round_up(n, m):
    return ((n + m - 1) // m) * m


# --------------------------------------------------------------------------
# Kernel
# --------------------------------------------------------------------------
def q1_net_kernel(x_ref, w1_ref, b1_ref, w2_ref, b2_ref, w3_ref, b3_ref, o_ref):
    # fc1 + ReLU  (bf16 MXU inputs, f32 accumulation, f32 bias/activation math)
    h1 = jnp.dot(x_ref[...], w1_ref[...], preferred_element_type=jnp.float32)
    h1 = jnp.maximum(h1 + b1_ref[...], 0.0)
    # fc2 + ReLU
    h2 = jnp.dot(h1.astype(jnp.bfloat16), w2_ref[...],
                 preferred_element_type=jnp.float32)
    h2 = jnp.maximum(h2 + b2_ref[...], 0.0)
    # fc3 (identity)
    out = jnp.dot(h2.astype(jnp.bfloat16), w3_ref[...],
                  preferred_element_type=jnp.float32)
    o_ref[...] = (out + b3_ref[...]).astype(o_ref.dtype)


# --------------------------------------------------------------------------
# Wrapper
# --------------------------------------------------------------------------
@functools.partial(jax.jit, static_argnames=("tb",))
def q1_net_forward(x, packed, *, tb=256):
    """x: (B, 48) float32. packed: output of pack_params() (padded, bf16 W)."""
    B = x.shape[0]
    TB = min(tb, _round_up(B, 8))       # batch tile (>= 8, <= tb)
    Bp = _round_up(B, TB)               # padded batch

    xp = x.astype(jnp.bfloat16)
    if Bp != B:
        xp = jnp.pad(xp, ((0, Bp - B), (0, 0)))

    grid = (Bp // TB,)

    def resident(shape):
        # Full-array block, same block index every grid step -> stays in VMEM.
        return pl.BlockSpec(shape, lambda i: (0, 0))

    flops = 2 * Bp * (D_IN * H1_PAD + H1_PAD * H2_PAD + H2_PAD * D_OUT_PAD)
    bytes_accessed = (
        xp.size * xp.dtype.itemsize
        + Bp * D_OUT_PAD * 4
        + sum(int(v.size) * v.dtype.itemsize for v in packed.values())
    )

    out = pl.pallas_call(
        q1_net_kernel,
        out_shape=jax.ShapeDtypeStruct((Bp, D_OUT_PAD), jnp.float32),
        grid=grid,
        in_specs=[
            pl.BlockSpec((TB, D_IN), lambda i: (i, 0)),   # x: batch-tiled
            resident((D_IN, H1_PAD)),                     # w1
            resident((1, H1_PAD)),                        # b1
            resident((H1_PAD, H2_PAD)),                   # w2
            resident((1, H2_PAD)),                        # b2
            resident((H2_PAD, D_OUT_PAD)),                # w3
            resident((1, D_OUT_PAD)),                     # b3
        ],
        out_specs=pl.BlockSpec((TB, D_OUT_PAD), lambda i: (i, 0)),
        compiler_params=pltpu.CompilerParams(
            dimension_semantics=("parallel",),
        ),
        cost_estimate=pl.CostEstimate(
            flops=flops, transcendentals=0, bytes_accessed=bytes_accessed),
    )(xp, packed["w1"], packed["b1"], packed["w2"], packed["b2"],
      packed["w3"], packed["b3"])

    return out[:B, :D_OUT]


# --------------------------------------------------------------------------
# Parameters
# --------------------------------------------------------------------------
def init_params(key):
    """PyTorch-equivalent shapes, stored transposed as (in, out); f32."""
    k1, k2, k3, k4, k5, k6 = jax.random.split(key, 6)

    def uniform_init(k, shape, fan_in):
        bound = 1.0 / jnp.sqrt(fan_in)
        return jax.random.uniform(k, shape, jnp.float32, -bound, bound)

    return {
        "w1": uniform_init(k1, (D_IN, H1), 48.0),
        "b1": uniform_init(k2, (1, H1), 48.0),
        "w2": uniform_init(k3, (H1, H2), 200.0),
        "b2": uniform_init(k4, (1, H2), 200.0),
        "w3": uniform_init(k5, (H2, D_OUT), 80.0),
        "b3": uniform_init(k6, (1, D_OUT), 80.0),
    }


def pack_params(params):
    """Zero-pad feature dims to lane multiples and cast weights to bf16
    (biases stay f32). Padding is exact: extra rows/cols are zero, so the
    padded network computes the same values in the real lanes."""
    def pad2(a, rows, cols):
        r, c = a.shape
        return jnp.pad(a, ((0, rows - r), (0, cols - c)))

    return {
        "w1": pad2(params["w1"], D_IN, H1_PAD).astype(jnp.bfloat16),
        "b1": pad2(params["b1"], 1, H1_PAD).astype(jnp.float32),
        "w2": pad2(params["w2"], H1_PAD, H2_PAD).astype(jnp.bfloat16),
        "b2": pad2(params["b2"], 1, H2_PAD).astype(jnp.float32),
        "w3": pad2(params["w3"], H2_PAD, D_OUT_PAD).astype(jnp.bfloat16),
        "b3": pad2(params["b3"], 1, D_OUT_PAD).astype(jnp.float32),
    }


# --------------------------------------------------------------------------
# References
# --------------------------------------------------------------------------
def q1_net_reference_f32(x, params):
    """Pure-f32 reference (matches the PyTorch module exactly)."""
    h1 = jnp.maximum(x @ params["w1"] + params["b1"], 0.0)
    h2 = jnp.maximum(h1 @ params["w2"] + params["b2"], 0.0)
    return h2 @ params["w3"] + params["b3"]


def q1_net_reference_packed(x, packed):
    """Reference mirroring the kernel's bf16-in / f32-accumulate math."""
    xb = x.astype(jnp.bfloat16)
    h1 = jnp.maximum(
        jnp.dot(xb, packed["w1"], preferred_element_type=jnp.float32)
        + packed["b1"], 0.0)
    h2 = jnp.maximum(
        jnp.dot(h1.astype(jnp.bfloat16), packed["w2"],
                preferred_element_type=jnp.float32) + packed["b2"], 0.0)
    out = jnp.dot(h2.astype(jnp.bfloat16), packed["w3"],
                  preferred_element_type=jnp.float32) + packed["b3"]
    return out[:, :D_OUT]


# --------------------------------------------------------------------------
if __name__ == "__main__":
    key = jax.random.PRNGKey(0)
    kx, kp = jax.random.split(key)

    B = 8  # small per-env-step batch; kernel also handles large training batches
    x = jax.random.normal(kx, (B, D_IN), dtype=jnp.float32)
    params = init_params(kp)
    packed = pack_params(params)

    out = q1_net_forward(x, packed)
    out = jax.block_until_ready(out)
    assert out.shape == (B, 1), out.shape

    # Tight check vs a reference that uses identical bf16 inputs/weights.
    ref_bf16 = q1_net_reference_packed(x, packed)
    assert jnp.allclose(out, ref_bf16, atol=1e-3, rtol=1e-3), (
        "mismatch vs bf16 reference")

    # Loose check vs the full-f32 PyTorch-equivalent math (bf16 rounding only).
    ref_f32 = q1_net_reference_f32(x, params)
    assert jnp.allclose(out, ref_f32, atol=5e-2, rtol=5e-2), (
        "mismatch vs f32 reference")

    print("KERNEL_OK")
</pallas_src>

<mosaic_0001>
module attributes {stable_mosaic.version = 11 : i64} {
  func.func @q1_net_kernel(%arg0: i32, %arg1: memref<8x48xbf16, #tpu.memory_space<vmem>>, %arg2: memref<48x256xbf16, #tpu.memory_space<vmem>>, %arg3: memref<1x256xf32, #tpu.memory_space<vmem>>, %arg4: memref<256x128xbf16, #tpu.memory_space<vmem>>, %arg5: memref<1x128xf32, #tpu.memory_space<vmem>>, %arg6: memref<128x128xbf16, #tpu.memory_space<vmem>>, %arg7: memref<1x128xf32, #tpu.memory_space<vmem>>, %arg8: memref<8x128xf32, #tpu.memory_space<vmem>>) attributes {dimension_semantics = [#tpu.dimension_semantics<parallel>], iteration_bounds = array<i64: 1>, scalar_prefetch = 0 : i64, scratch_operands = 0 : i64, tpu.core_type = #tpu.core_type<tc>, window_params = [{transform_indices = @transform_0, window_bounds = array<i64: 8, 48>}, {pipeline_mode = #tpu.pipeline_mode<synchronous>, transform_indices = @transform_1, window_bounds = array<i64: 48, 256>}, {pipeline_mode = #tpu.pipeline_mode<synchronous>, transform_indices = @transform_2, window_bounds = array<i64: 1, 256>}, {pipeline_mode = #tpu.pipeline_mode<synchronous>, transform_indices = @transform_3, window_bounds = array<i64: 256, 128>}, {pipeline_mode = #tpu.pipeline_mode<synchronous>, transform_indices = @transform_4, window_bounds = array<i64: 1, 128>}, {pipeline_mode = #tpu.pipeline_mode<synchronous>, transform_indices = @transform_5, window_bounds = array<i64: 128, 128>}, {pipeline_mode = #tpu.pipeline_mode<synchronous>, transform_indices = @transform_6, window_bounds = array<i64: 1, 128>}, {transform_indices = @transform_7, window_bounds = array<i64: 8, 128>}]} {
    %c0 = arith.constant 0 : index
    %c0_0 = arith.constant 0 : index
    %0 = vector.load %arg1[%c0, %c0_0] : memref<8x48xbf16, #tpu.memory_space<vmem>>, vector<8x48xbf16>
    %c0_1 = arith.constant 0 : index
    %c0_2 = arith.constant 0 : index
    %1 = vector.load %arg2[%c0_1, %c0_2] : memref<48x256xbf16, #tpu.memory_space<vmem>>, vector<48x256xbf16>
    %cst = arith.constant dense<0.000000e+00> : vector<8x256xf32>
    %2 = tpu.matmul %0, %1, %cst {dimension_numbers = #tpu.dot_dimension_numbers<[1], [0], [0], [1], [0, 0, 1, 1], [], []>} : vector<8x48xbf16>, vector<48x256xbf16>, vector<8x256xf32> -> vector<8x256xf32>
    %c0_3 = arith.constant 0 : index
    %c0_4 = arith.constant 0 : index
    %3 = vector.load %arg3[%c0_3, %c0_4] : memref<1x256xf32, #tpu.memory_space<vmem>>, vector<1x256xf32>
    %4 = vector.broadcast %3 : vector<1x256xf32> to vector<8x256xf32>
    %5 = arith.addf %2, %4 : vector<8x256xf32>
    %cst_5 = arith.constant 0.000000e+00 : f32
    %6 = vector.broadcast %cst_5 : f32 to vector<8x256xf32>
    %7 = arith.maximumf %5, %6 : vector<8x256xf32>
    %8 = arith.truncf %7 : vector<8x256xf32> to vector<8x256xbf16>
    %c0_6 = arith.constant 0 : index
    %c0_7 = arith.constant 0 : index
    %9 = vector.load %arg4[%c0_6, %c0_7] : memref<256x128xbf16, #tpu.memory_space<vmem>>, vector<256x128xbf16>
    %cst_8 = arith.constant dense<0.000000e+00> : vector<8x128xf32>
    %10 = tpu.matmul %8, %9, %cst_8 {dimension_numbers = #tpu.dot_dimension_numbers<[1], [0], [0], [1], [0, 0, 1, 1], [], []>} : vector<8x256xbf16>, vector<256x128xbf16>, vector<8x128xf32> -> vector<8x128xf32>
    %c0_9 = arith.constant 0 : index
    %c0_10 = arith.constant 0 : index
    %11 = vector.load %arg5[%c0_9, %c0_10] : memref<1x128xf32, #tpu.memory_space<vmem>>, vector<1x128xf32>
    %12 = vector.broadcast %11 : vector<1x128xf32> to vector<8x128xf32>
    %13 = arith.addf %10, %12 : vector<8x128xf32>
    %cst_11 = arith.constant 0.000000e+00 : f32
    %14 = vector.broadcast %cst_11 : f32 to vector<8x128xf32>
    %15 = arith.maximumf %13, %14 : vector<8x128xf32>
    %16 = arith.truncf %15 : vector<8x128xf32> to vector<8x128xbf16>
    %c0_12 = arith.constant 0 : index
    %c0_13 = arith.constant 0 : index
    %17 = vector.load %arg6[%c0_12, %c0_13] : memref<128x128xbf16, #tpu.memory_space<vmem>>, vector<128x128xbf16>
    %cst_14 = arith.constant dense<0.000000e+00> : vector<8x128xf32>
    %18 = tpu.matmul %16, %17, %cst_14 {dimension_numbers = #tpu.dot_dimension_numbers<[1], [0], [0], [1], [0, 0, 1, 1], [], []>} : vector<8x128xbf16>, vector<128x128xbf16>, vector<8x128xf32> -> vector<8x128xf32>
    %c0_15 = arith.constant 0 : index
    %c0_16 = arith.constant 0 : index
    %19 = vector.load %arg7[%c0_15, %c0_16] : memref<1x128xf32, #tpu.memory_space<vmem>>, vector<1x128xf32>
    %20 = vector.broadcast %19 : vector<1x128xf32> to vector<8x128xf32>
    %21 = arith.addf %18, %20 : vector<8x128xf32>
    %c0_17 = arith.constant 0 : index
    %c0_18 = arith.constant 0 : index
    %22 = vector.load %arg8[%c0_17, %c0_18] : memref<8x128xf32, #tpu.memory_space<vmem>>, vector<8x128xf32>
    tpu.vector_store %arg8[%c0_17, %c0_18], %21 {strides = array<i32>} : memref<8x128xf32, #tpu.memory_space<vmem>>, vector<8x128xf32>,
    return
  }
  func.func @transform_0(%arg0: i32) -> (i32, i32) {
    %c0_i32 = arith.constant 0 : i32
    %c0_i32_0 = arith.constant 0 : i32
    return %arg0, %c0_i32 : i32, i32
  }
  func.func @transform_1(%arg0: i32) -> (i32, i32) {
    %c0_i32 = arith.constant 0 : i32
    %c0_i32_0 = arith.constant 0 : i32
    %c0_i32_1 = arith.constant 0 : i32
    return %c0_i32, %c0_i32_0 : i32, i32
  }
  func.func @transform_2(%arg0: i32) -> (i32, i32) {
    %c0_i32 = arith.constant 0 : i32
    %c0_i32_0 = arith.constant 0 : i32
    %c0_i32_1 = arith.constant 0 : i32
    return %c0_i32, %c0_i32_0 : i32, i32
  }
  func.func @transform_3(%arg0: i32) -> (i32, i32) {
    %c0_i32 = arith.constant 0 : i32
    %c0_i32_0 = arith.constant 0 : i32
    %c0_i32_1 = arith.constant 0 : i32
    return %c0_i32, %c0_i32_0 : i32, i32
  }
  func.func @transform_4(%arg0: i32) -> (i32, i32) {
    %c0_i32 = arith.constant 0 : i32
    %c0_i32_0 = arith.constant 0 : i32
    %c0_i32_1 = arith.constant 0 : i32
    return %c0_i32, %c0_i32_0 : i32, i32
  }
  func.func @transform_5(%arg0: i32) -> (i32, i32) {
    %c0_i32 = arith.constant 0 : i32
    %c0_i32_0 = arith.constant 0 : i32
    %c0_i32_1 = arith.constant 0 : i32
    return %c0_i32, %c0_i32_0 : i32, i32
  }
  func.func @transform_6(%arg0: i32) -> (i32, i32) {
    %c0_i32 = arith.constant 0 : i32
    %c0_i32_0 = arith.constant 0 : i32
    %c0_i32_1 = arith.constant 0 : i32
    return %c0_i32, %c0_i32_0 : i32, i32
  }
  func.func @transform_7(%arg0: i32) -> (i32, i32) {
    %c0_i32 = arith.constant 0 : i32
    %c0_i32_0 = arith.constant 0 : i32
    return %arg0, %c0_i32 : i32, i32
  }
}

</mosaic_0001>

<llo_original>
// kernel: q1_net_forward.1
$region0: #{q1_net_forward.1}
  #allocation0 [shape = 'u32[]', space=smem, size = 0x4, offset = 0x4, fixed_abs, tag = 'smem constant byte address 0x4 - core index']
  #allocation1 [shape = 'u32[144,128]{1,0:T(1,128)}', space=vmem, size = 0x12000, scoped, tag = 'internal scratch']
  %s0 = inlined_call_operand.vmem [shape: bf16[8,48], index: 0, kind: input, shape index: {}]
  %s1 = inlined_call_operand.hbm [shape: bf16[48,256], index: 1, kind: input, shape index: {}]
  %s2 = inlined_call_operand.vmem [shape: f32[1,256], index: 2, kind: input, shape index: {}]
  %s3 = inlined_call_operand.hbm [shape: bf16[256,128], index: 3, kind: input, shape index: {}]
  %s4 = inlined_call_operand.vmem [shape: f32[1,128], index: 4, kind: input, shape index: {}]
  %s5 = inlined_call_operand.hbm [shape: bf16[128,128], index: 5, kind: input, shape index: {}]
  %s6 = inlined_call_operand.vmem [shape: f32[1,128], index: 6, kind: input, shape index: {}]
  %s7 = inlined_call_operand.vmem [shape: f32[8,128], index: 7, kind: output, shape index: {}]
  %s8 = sld [smem:[#allocation0]]
  $region50: #{q1_net_forward.1} parent=0
    _
  %s10 = ssub.s32 1, %s8
  %s11 = scalar_select 0, %s10, %s8
  $region1: #{q1_net_forward.1} parent=0
    #allocation2 [shape = 'u8[24576]{0}', space=vmem, size = 0x6000, scoped, tag = 'input window, operand 1, single buffered']
    #allocation3 [shape = 's32[1]{0}', space=sflag, size = 0x4, scoped, tag = 'scoped memory for q1_net_forward.1']
    #allocation4 [shape = 'u8[65536]{0}', space=vmem, size = 0x10000, scoped, tag = 'input window, operand 3, single buffered']
    #allocation5 [shape = 's32[1]{0}', space=sflag, size = 0x4, scoped, tag = 'scoped memory for q1_net_forward.1']
    #allocation6 [shape = 'u8[32768]{0}', space=vmem, size = 0x8000, scoped, tag = 'input window, operand 5, single buffered']
    %12 = vsyncpa [#allocation3], 0
    %13 = vsyncpa [#allocation5], 0
    // Predicated region
    $region2: #{q1_net_forward.1} parent=1 // pred_check
      _
    $region3: #{q1_net_forward.1} parent=1 // pred_check_branch
      %15 = sbr.rel (0) target = $region5
    $region4: #{q1_net_forward.1} parent=1 // pred_region
      _
    $region5: #{q1_net_forward.1} parent=1 // pred_fallthru
      _
    // Predicated region
    $region6: #{q1_net_forward.1} parent=1 // pred_check
      _
    $region7: #{q1_net_forward.1} parent=1 // pred_check_branch
      %17 = sbr.rel (0) target = $region9
    $region8: #{q1_net_forward.1} parent=1 // pred_region
      %s19 = ssub.s32 768, 768
      %20 = vsyncadd [#allocation3], %s19
      %s21 = sshll.u32 [#allocation2], 4
      %s22 = int_to_ptr.vmem [resolvable:$true] %s21
      %27 = dma.hbm_to_vmem [thread:$0]  %s1, 768, %s22, [#allocation3], 128, 128, 8
    $region9: #{q1_net_forward.1} parent=1 // pred_fallthru
      _
    // Predicated region
    $region10: #{q1_net_forward.1} parent=1 // pred_check
      _
    $region11: #{q1_net_forward.1} parent=1 // pred_check_branch
      %29 = sbr.rel (0) target = $region13
    $region12: #{q1_net_forward.1} parent=1 // pred_region
      _
    $region13: #{q1_net_forward.1} parent=1 // pred_fallthru
      _
    // Predicated region
    $region14: #{q1_net_forward.1} parent=1 // pred_check
      _
    $region15: #{q1_net_forward.1} parent=1 // pred_check_branch
      %31 = sbr.rel (0) target = $region17
    $region16: #{q1_net_forward.1} parent=1 // pred_region
      %s33 = ssub.s32 2048, 2048
      %34 = vsyncadd [#allocation5], %s33
      %s35 = sshll.u32 [#allocation4], 4
      %s36 = int_to_ptr.vmem [resolvable:$true] %s35
      %41 = dma.hbm_to_vmem [thread:$0]  %s3, 2048, %s36, [#allocation5], 64, 64, 4
    $region17: #{q1_net_forward.1} parent=1 // pred_fallthru
      _
    // Predicated region
    $region18: #{q1_net_forward.1} parent=1 // pred_check
      _
    $region19: #{q1_net_forward.1} parent=1 // pred_check_branch
      %43 = sbr.rel (0) target = $region21
    $region20: #{q1_net_forward.1} parent=1 // pred_region
      _
    $region21: #{q1_net_forward.1} parent=1 // pred_fallthru
      _
    // Predicated region
    $region22: #{q1_net_forward.1} parent=1 // pred_check
      _
    $region23: #{q1_net_forward.1} parent=1 // pred_check_branch
      %45 = sbr.rel (0) target = $region25
    $region24: #{q1_net_forward.1} parent=1 // pred_region
      %s47 = ssub.s32 1024, 1024
      %48 = vsyncadd [#allocation5], %s47
      %s49 = sshll.u32 [#allocation6], 4
      %s50 = int_to_ptr.vmem [resolvable:$true] %s49
      %55 = dma.hbm_to_vmem [thread:$0]  %s5, 1024, %s50, [#allocation5], 64, 64, 4
    $region25: #{q1_net_forward.1} parent=1 // pred_fallthru
      _
    // Predicated region
    $region26: #{q1_net_forward.1} parent=1 // pred_check
      _
    $region27: #{q1_net_forward.1} parent=1 // pred_check_branch
      %57 = sbr.rel (0) target = $region29
    $region28: #{q1_net_forward.1} parent=1 // pred_region
      _
    $region29: #{q1_net_forward.1} parent=1 // pred_fallthru
      _
    // Predicated region
    $region30: #{q1_net_forward.1} parent=1 // pred_check
      _
    $region31: #{q1_net_forward.1} parent=1 // pred_check_branch
      %59 = sbr.rel (0) target = $region33
    $region32: #{q1_net_forward.1} parent=1 // pred_region
      %60 = dma.done [#allocation3], 768
    $region33: #{q1_net_forward.1} parent=1 // pred_fallthru
      _
    // Predicated region
    $region34: #{q1_net_forward.1} parent=1 // pred_check
      _
    $region35: #{q1_net_forward.1} parent=1 // pred_check_branch
      %62 = sbr.rel (0) target = $region37
    $region36: #{q1_net_forward.1} parent=1 // pred_region
      %63 = dma.done [#allocation5], 2048
    $region37: #{q1_net_forward.1} parent=1 // pred_fallthru
      _
    // Predicated region
    $region38: #{q1_net_forward.1} parent=1 // pred_check
      _
    $region39: #{q1_net_forward.1} parent=1 // pred_check_branch
      %65 = sbr.rel (0) target = $region41
    $region40: #{q1_net_forward.1} parent=1 // pred_region
      %66 = dma.done [#allocation5], 1024
    $region41: #{q1_net_forward.1} parent=1 // pred_fallthru
      _
    %v68 = vld [vmem:[%s0] sm:$0xf]
    %v69 = vld [vmem:[#allocation2] sm:$0xff]
    %v70 = vld [vmem:[#allocation2 + $0x8] sm:$0xff]
    %v71 = vld [vmem:[#allocation2 + $0x10] sm:$0xff]
    %v72 = vld [vmem:[#allocation2 + $0x18] sm:$0xff]
    %v73 = vld [vmem:[#allocation2 + $0x20] sm:$0xff]
    %v74 = vld [vmem:[#allocation2 + $0x28] sm:$0xff]
    %v75 = vld [vmem:[%s2] sm:$0x3]
    %v77 = vlaneseq
    %v78 = vshrl.u32 %v77, 7
    %v79 = vsub.s32 0, %v78
    %v80 = vrot.slane %v75, %v79
    %v81 = vlaneseq
    %v82 = vshrl.u32 %v81, 7
    %v83 = vsub.s32 1, %v82
    %v84 = vrot.slane %v75, %v83
    %v93 = vunpack.c.l.b16 %v69
    %v94 = vunpack.c.h.b16 %v69
    %v95 = vunpack.c.l.b16 %v70
    %v96 = vunpack.c.h.b16 %v70
    %v97 = vunpack.c.l.b16 %v71
    %v98 = vunpack.c.h.b16 %v71
    %v99 = vunpack.c.l.b16 %v72
    %v100 = vunpack.c.h.b16 %v72
    %v101 = vunpack.c.l.b16 %v73
    %v102 = vunpack.c.h.b16 %v73
    %v103 = vunpack.c.l.b16 %v74
    %v104 = vunpack.c.h.b16 %v74
    %v105 = vpack.c.b16 %v95, %v93
    %v106 = vpack.c.b16 %v96, %v94
    %v107 = vpack.c.b16 %v99, %v97
    %v108 = vpack.c.b16 %v100, %v98
    %v109 = vpack.c.b16 %v103, %v101
    %v110 = vpack.c.b16 %v104, %v102
    %vm117 = vcmask 392192
    %v119 = vsel %vm117, %v68, 0
    %121 = vmatprep.subr.bf16.mxu0 %v106
    %122 = vmatpush1.bf16.msra.mxu0 %v105
    %123 = vmatprep.subr.bf16.mxu0 %v108
    %124 = vmatpush1.bf16.msra.mxu0 %v107
    %125 = vmatprep.subr.bf16.mxu0 %v110
    %126 = vmatpush1.bf16.msra.mxu0 %v109
    %127 = vmatprep.subr.bf16.mxu0 0
    %128 = vmatpush1.bf16.msra.mxu0 0
    %129 = vmatprep.subr.bf16.mxu0 0
    %130 = vmatpush1.bf16.msra.mxu0 0
    %131 = vmatprep.subr.bf16.mxu0 0
    %132 = vmatpush1.bf16.msra.mxu0 0
    %133 = vmatprep.subr.bf16.mxu0 0
    %134 = vmatpush1.bf16.msra.mxu0 0
    %135 = vmatprep.subr.bf16.mxu0 0
    %136 = vmatpush1.bf16.msra.mxu0 0
    %137 = vmatprep.subr.bf16.mxu0 0
    %138 = vmatpush1.bf16.msra.mxu0 0
    %139 = vmatprep.subr.bf16.mxu0 0
    %140 = vmatpush1.bf16.msra.mxu0 0
    %141 = vmatprep.subr.bf16.mxu0 0
    %142 = vmatpush1.bf16.msra.mxu0 0
    %143 = vmatprep.subr.bf16.mxu0 0
    %144 = vmatpush1.bf16.msra.mxu0 0
    %145 = vmatprep.subr.bf16.mxu0 0
    %146 = vmatpush1.bf16.msra.mxu0 0
    %147 = vmatprep.subr.bf16.mxu0 0
    %148 = vmatpush1.bf16.msra.mxu0 0
    %149 = vmatprep.subr.bf16.mxu0 0
    %150 = vmatpush1.bf16.msra.mxu0 0
    %151 = vmatprep.subr.bf16.mxu0 0
    %152 = vmatpush1.bf16.msra.mxu0 0
    %153 = vmatprep.mubr.bf16.mxu0 0
    %154 = vmatmul.mubr.bf16.gmra.mrb[0].mxu0 %v119
    %v155 = vpop.f32.mrb[0].mxu0
    %v156 = vadd.f32 %v80, %v155
    %v157 = vpop.f32.mrb[0].mxu0
    %v158 = vadd.f32 %v84, %v157
    %v159 = vpop.f32.mrb[0].mxu0
    %v160 = vpop.f32.mrb[0].mxu0
    %161 = vdwg.mxu0
    %v162 = vmax.f32 %v156, 0.0
    %v163 = vmax.f32 %v158, 0.0
    %v164 = vpack.c.bf16 %v162, %v162
    %v165 = vpack.c.bf16 %v163, %v163
    %v166 = vld [vmem:[#allocation4] sm:$0xf]
    %v167 = vld [vmem:[#allocation4 + $0x4] sm:$0xf]
    %v168 = vld [vmem:[#allocation4 + $0x8] sm:$0xf]
    %v169 = vld [vmem:[#allocation4 + $0xc] sm:$0xf]
    %v170 = vld [vmem:[#allocation4 + $0x10] sm:$0xf]
    %v171 = vld [vmem:[#allocation4 + $0x14] sm:$0xf]
    %v172 = vld [vmem:[#allocation4 + $0x18] sm:$0xf]
    %v173 = vld [vmem:[#allocation4 + $0x1c] sm:$0xf]
    %v174 = vld [vmem:[#allocation4 + $0x20] sm:$0xf]
    %v175 = vld [vmem:[#allocation4 + $0x24] sm:$0xf]
    %v176 = vld [vmem:[#allocation4 + $0x28] sm:$0xf]
    %v177 = vld [vmem:[#allocation4 + $0x2c] sm:$0xf]
    %v178 = vld [vmem:[#allocation4 + $0x30] sm:$0xf]
    %v179 = vld [vmem:[#allocation4 + $0x34] sm:$0xf]
    %v180 = vld [vmem:[#allocation4 + $0x38] sm:$0xf]
    %v181 = vld [vmem:[#allocation4 + $0x3c] sm:$0xf]
    %v182 = vld [vmem:[#allocation4 + $0x40] sm:$0xf]
    %v183 = vld [vmem:[#allocation4 + $0x44] sm:$0xf]
    %v184 = vld [vmem:[#allocation4 + $0x48] sm:$0xf]
    %v185 = vld [vmem:[#allocation4 + $0x4c] sm:$0xf]
    %v186 = vld [vmem:[#allocation4 + $0x50] sm:$0xf]
    %v187 = vld [vmem:[#allocation4 + $0x54] sm:$0xf]
    %v188 = vld [vmem:[#allocation4 + $0x58] sm:$0xf]
    %v189 = vld [vmem:[#allocation4 + $0x5c] sm:$0xf]
    %v190 = vld [vmem:[#allocation4 + $0x60] sm:$0xf]
    %v191 = vld [vmem:[#allocation4 + $0x64] sm:$0xf]
    %v192 = vld [vmem:[#allocation4 + $0x68] sm:$0xf]
    %v193 = vld [vmem:[#allocation4 + $0x6c] sm:$0xf]
    %v194 = vld [vmem:[#allocation4 + $0x70] sm:$0xf]
    %v195 = vld [vmem:[#allocation4 + $0x74] sm:$0xf]
    %v196 = vld [vmem:[#allocation4 + $0x78] sm:$0xf]
    %v197 = vld [vmem:[#allocation4 + $0x7c] sm:$0xf]
    %v198 = vld [vmem:[%s4] sm:$0x1]
    %v200 = vlaneseq
    %v201 = vshrl.u32 %v200, 7
    %v202 = vsub.s32 0, %v201
    %v203 = vrot.slane %v198, %v202
    %v237 = vunpack.c.l.b16 %v166
    %v238 = vunpack.c.l.b16 %v167
    %v239 = vunpack.c.l.b16 %v168
    %v240 = vunpack.c.l.b16 %v169
    %v241 = vunpack.c.l.b16 %v170
    %v242 = vunpack.c.l.b16 %v171
    %v243 = vunpack.c.l.b16 %v172
    %v244 = vunpack.c.l.b16 %v173
    %v245 = vunpack.c.l.b16 %v174
    %v246 = vunpack.c.l.b16 %v175
    %v247 = vunpack.c.l.b16 %v176
    %v248 = vunpack.c.l.b16 %v177
    %v249 = vunpack.c.l.b16 %v178
    %v250 = vunpack.c.l.b16 %v179
    %v251 = vunpack.c.l.b16 %v180
    %v252 = vunpack.c.l.b16 %v181
    %v253 = vunpack.c.l.b16 %v182
    %v254 = vunpack.c.l.b16 %v183
    %v255 = vunpack.c.l.b16 %v184
    %v256 = vunpack.c.l.b16 %v185
    %v257 = vunpack.c.l.b16 %v186
    %v258 = vunpack.c.l.b16 %v187
    %v259 = vunpack.c.l.b16 %v188
    %v260 = vunpack.c.l.b16 %v189
    %v261 = vunpack.c.l.b16 %v190
    %v262 = vunpack.c.l.b16 %v191
    %v263 = vunpack.c.l.b16 %v192
    %v264 = vunpack.c.l.b16 %v193
    %v265 = vunpack.c.l.b16 %v194
    %v266 = vunpack.c.l.b16 %v195
    %v267 = vunpack.c.l.b16 %v196
    %v268 = vunpack.c.l.b16 %v197
    %v269 = vpack.c.b16 %v238, %v237
    %v270 = vpack.c.b16 %v240, %v239
    %v271 = vpack.c.b16 %v242, %v241
    %v272 = vpack.c.b16 %v244, %v243
    %v273 = vpack.c.b16 %v246, %v245
    %v274 = vpack.c.b16 %v248, %v247
    %v275 = vpack.c.b16 %v250, %v249
    %v276 = vpack.c.b16 %v252, %v251
    %v277 = vpack.c.b16 %v254, %v253
    %v278 = vpack.c.b16 %v256, %v255
    %v279 = vpack.c.b16 %v258, %v257
    %v280 = vpack.c.b16 %v260, %v259
    %v281 = vpack.c.b16 %v262, %v261
    %v282 = vpack.c.b16 %v264, %v263
    %v283 = vpack.c.b16 %v266, %v265
    %v284 = vpack.c.b16 %v268, %v267
    %301 = vmatprep.subr.bf16.mxu0 0
    %302 = vmatpush1.bf16.msra.mxu0 %v269
    %303 = vmatprep.subr.bf16.mxu0 0
    %304 = vmatpush1.bf16.msra.mxu0 %v270
    %305 = vmatprep.subr.bf16.mxu0 0
    %306 = vmatpush1.bf16.msra.mxu0 %v271
    %307 = vmatprep.subr.bf16.mxu0 0
    %308 = vmatpush1.bf16.msra.mxu0 %v272
    %309 = vmatprep.subr.bf16.mxu0 0
    %310 = vmatpush1.bf16.msra.mxu0 %v273
    %311 = vmatprep.subr.bf16.mxu0 0
    %312 = vmatpush1.bf16.msra.mxu0 %v274
    %313 = vmatprep.subr.bf16.mxu0 0
    %314 = vmatpush1.bf16.msra.mxu0 %v275
    %315 = vmatprep.subr.bf16.mxu0 0
    %316 = vmatpush1.bf16.msra.mxu0 %v276
    %317 = vmatprep.subr.bf16.mxu0 0
    %318 = vmatpush1.bf16.msra.mxu0 %v277
    %319 = vmatprep.subr.bf16.mxu0 0
    %320 = vmatpush1.bf16.msra.mxu0 %v278
    %321 = vmatprep.subr.bf16.mxu0 0
    %322 = vmatpush1.bf16.msra.mxu0 %v279
    %323 = vmatprep.subr.bf16.mxu0 0
    %324 = vmatpush1.bf16.msra.mxu0 %v280
    %325 = vmatprep.subr.bf16.mxu0 0
    %326 = vmatpush1.bf16.msra.mxu0 %v281
    %327 = vmatprep.subr.bf16.mxu0 0
    %328 = vmatpush1.bf16.msra.mxu0 %v282
    %329 = vmatprep.subr.bf16.mxu0 0
    %330 = vmatpush1.bf16.msra.mxu0 %v283
    %331 = vmatprep.subr.bf16.mxu0 0
    %332 = vmatpush1.bf16.msra.mxu0 %v284
    %333 = vmatprep.mubr.bf16.mxu0 %v165
    %334 = vmatmul.mubr.bf16.gmra.mrb[0].mxu0 %v164
    %v335 = vpop.f32.mrb[0].mxu0
    %v336 = vadd.f32 %v203, %v335
    %v337 = vpop.f32.mrb[0].mxu0
    %v338 = vpop.f32.mrb[0].mxu0
    %v339 = vpop.f32.mrb[0].mxu0
    %340 = vdwg.mxu0
    %v341 = vmax.f32 %v336, 0.0
    %v342 = vpack.c.bf16 %v341, %v341
    %v343 = vld [vmem:[#allocation6] sm:$0xf]
    %v344 = vld [vmem:[#allocation6 + $0x4] sm:$0xf]
    %v345 = vld [vmem:[#allocation6 + $0x8] sm:$0xf]
    %v346 = vld [vmem:[#allocation6 + $0xc] sm:$0xf]
    %v347 = vld [vmem:[#allocation6 + $0x10] sm:$0xf]
    %v348 = vld [vmem:[#allocation6 + $0x14] sm:$0xf]
    %v349 = vld [vmem:[#allocation6 + $0x18] sm:$0xf]
    %v350 = vld [vmem:[#allocation6 + $0x1c] sm:$0xf]
    %v351 = vld [vmem:[#allocation6 + $0x20] sm:$0xf]
    %v352 = vld [vmem:[#allocation6 + $0x24] sm:$0xf]
    %v353 = vld [vmem:[#allocation6 + $0x28] sm:$0xf]
    %v354 = vld [vmem:[#allocation6 + $0x2c] sm:$0xf]
    %v355 = vld [vmem:[#allocation6 + $0x30] sm:$0xf]
    %v356 = vld [vmem:[#allocation6 + $0x34] sm:$0xf]
    %v357 = vld [vmem:[#allocation6 + $0x38] sm:$0xf]
    %v358 = vld [vmem:[#allocation6 + $0x3c] sm:$0xf]
    %v359 = vld [vmem:[%s6] sm:$0x1]
    %v361 = vlaneseq
    %v362 = vshrl.u32 %v361, 7
    %v363 = vsub.s32 0, %v362
    %v364 = vrot.slane %v359, %v363
    %v382 = vunpack.c.l.b16 %v343
    %v383 = vunpack.c.l.b16 %v344
    %v384 = vunpack.c.l.b16 %v345
    %v385 = vunpack.c.l.b16 %v346
    %v386 = vunpack.c.l.b16 %v347
    %v387 = vunpack.c.l.b16 %v348
    %v388 = vunpack.c.l.b16 %v349
    %v389 = vunpack.c.l.b16 %v350
    %v390 = vunpack.c.l.b16 %v351
    %v391 = vunpack.c.l.b16 %v352
    %v392 = vunpack.c.l.b16 %v353
    %v393 = vunpack.c.l.b16 %v354
    %v394 = vunpack.c.l.b16 %v355
    %v395 = vunpack.c.l.b16 %v356
    %v396 = vunpack.c.l.b16 %v357
    %v397 = vunpack.c.l.b16 %v358
    %v398 = vpack.c.b16 %v383, %v382
    %v399 = vpack.c.b16 %v385, %v384
    %v400 = vpack.c.b16 %v387, %v386
    %v401 = vpack.c.b16 %v389, %v388
    %v402 = vpack.c.b16 %v391, %v390
    %v403 = vpack.c.b16 %v393, %v392
    %v404 = vpack.c.b16 %v395, %v394
    %v405 = vpack.c.b16 %v397, %v396
    %414 = vmatprep.subr.bf16.mxu0 0
    %415 = vmatpush1.bf16.msra.mxu0 %v398
    %416 = vmatprep.subr.bf16.mxu0 0
    %417 = vmatpush1.bf16.msra.mxu0 %v399
    %418 = vmatprep.subr.bf16.mxu0 0
    %419 = vmatpush1.bf16.msra.mxu0 %v400
    %420 = vmatprep.subr.bf16.mxu0 0
    %421 = vmatpush1.bf16.msra.mxu0 %v401
    %422 = vmatprep.subr.bf16.mxu0 0
    %423 = vmatpush1.bf16.msra.mxu0 %v402
    %424 = vmatprep.subr.bf16.mxu0 0
    %425 = vmatpush1.bf16.msra.mxu0 %v403
    %426 = vmatprep.subr.bf16.mxu0 0
    %427 = vmatpush1.bf16.msra.mxu0 %v404
    %428 = vmatprep.subr.bf16.mxu0 0
    %429 = vmatpush1.bf16.msra.mxu0 %v405
    %430 = vmatprep.subr.bf16.mxu0 0
    %431 = vmatpush1.bf16.msra.mxu0 0
    %432 = vmatprep.subr.bf16.mxu0 0
    %433 = vmatpush1.bf16.msra.mxu0 0
    %434 = vmatprep.subr.bf16.mxu0 0
    %435 = vmatpush1.bf16.msra.mxu0 0
    %436 = vmatprep.subr.bf16.mxu0 0
    %437 = vmatpush1.bf16.msra.mxu0 0
    %438 = vmatprep.subr.bf16.mxu0 0
    %439 = vmatpush1.bf16.msra.mxu0 0
    %440 = vmatprep.subr.bf16.mxu0 0
    %441 = vmatpush1.bf16.msra.mxu0 0
    %442 = vmatprep.subr.bf16.mxu0 0
    %443 = vmatpush1.bf16.msra.mxu0 0
    %444 = vmatprep.subr.bf16.mxu0 0
    %445 = vmatpush1.bf16.msra.mxu0 0
    %446 = vmatprep.mubr.bf16.mxu0 0
    %447 = vmatmul.mubr.bf16.gmra.mrb[0].mxu0 %v342
    %v448 = vpop.f32.mrb[0].mxu0
    %v449 = vadd.f32 %v364, %v448
    %v450 = vpop.f32.mrb[0].mxu0
    %v451 = vpop.f32.mrb[0].mxu0
    %v452 = vpop.f32.mrb[0].mxu0
    %453 = vdwg.mxu0
    %454 = vst [vmem:[%s7] sm:$0xff] %v449
    // Predicated region
    $region42: #{q1_net_forward.1} parent=1 // pred_check
      _
    $region43: #{q1_net_forward.1} parent=1 // pred_check_branch
      %456 = sbr.rel (0) target = $region45
    $region44: #{q1_net_forward.1} parent=1 // pred_region
      _
    $region45: #{q1_net_forward.1} parent=1 // pred_fallthru
      _
    // Predicated region
    $region46: #{q1_net_forward.1} parent=1 // pred_check
      _
    $region47: #{q1_net_forward.1} parent=1 // pred_check_branch
      %458 = sbr.rel (0) target = $region49
    $region48: #{q1_net_forward.1} parent=1 // pred_region
      _
    $region49: #{q1_net_forward.1} parent=1 // pred_fallthru
      _
    %459 = vsyncpa [#allocation3], 1
    %460 = vsyncpa [#allocation5], 1

</llo_original>
